<compile_context>
chip_gen: v5e
topology: v5e:2x2
jax: 0.10.0
libtpu: 0.0.40
codegen_flags: <defaults>
</compile_context>

<pallas_src>
import math

import jax
import jax.numpy as jnp
from jax import lax
from jax.experimental import pallas as pl
from jax.experimental.pallas import tpu as pltpu


def _round_up(x, m):
    return ((x + m - 1) // m) * m


# ---------------------------------------------------------------------------
# Kernel 1: fused QKV projection (one wide matmul, lane-dense outputs).
# The 1/sqrt(d_k) softmax scale is pre-folded into W_query by the wrapper.
# ---------------------------------------------------------------------------
def _qkv_proj_kernel(x_ref, w_ref, q_ref, k_ref, v_ref):
    # x_ref: (1, t, d_in_p); w_ref: (d_in_p, 3*d_out_p); q/k/v_ref: (1, t, d_out_p)
    d = q_ref.shape[-1]
    qkv = jnp.dot(x_ref[0], w_ref[...], preferred_element_type=jnp.float32)
    q_ref[0] = qkv[:, :d].astype(q_ref.dtype)
    k_ref[0] = qkv[:, d:2 * d].astype(k_ref.dtype)
    v_ref[0] = qkv[:, 2 * d:].astype(v_ref.dtype)


# ---------------------------------------------------------------------------
# Kernel 2: flash-style causal attention on a lower-triangular grid schedule.
# Grid: (batch, n_steps), n_steps = n_t*(n_t+1)//2.  The scalar-prefetched
# qi_map/ki_map give the (q-tile, kv-tile) coordinate of each step; for a
# given q tile its kv steps are contiguous and end on the diagonal, so the
# accumulators init at ki == 0 and finalize at ki == qi.  Requires tq == tk.
# ---------------------------------------------------------------------------
def _flash_causal_kernel(qi_map, ki_map, q_ref, k_ref, v_ref, o_ref,
                         m_sc, l_sc, acc_sc):
    step = pl.program_id(1)
    qi = qi_map[step]
    ki = ki_map[step]
    on_diag = ki == qi

    @pl.when(ki == 0)
    def _init():
        m_sc[...] = jnp.full(m_sc.shape, -jnp.inf, m_sc.dtype)
        l_sc[...] = jnp.zeros(l_sc.shape, l_sc.dtype)
        acc_sc[...] = jnp.zeros(acc_sc.shape, acc_sc.dtype)

    q = q_ref[0]                      # (t, d)  compute dtype
    k = k_ref[0]
    v = v_ref[0]
    # Contract the last dims directly (no k.T relayout); accumulate in f32.
    s = lax.dot_general(
        q, k, dimension_numbers=(((1,), (1,)), ((), ())),
        preferred_element_type=jnp.float32)               # (t, t)

    # Causal mask only bites on the diagonal tile (tq == tk -> local indices
    # suffice; padded key columns only ever appear in that tile too).  Building
    # the iota mask unconditionally is VPU-slot filler; predicating on the
    # scalar `on_diag` keeps a single traced copy of the update pipeline.
    r = lax.broadcasted_iota(jnp.int32, s.shape, 0)
    c = lax.broadcasted_iota(jnp.int32, s.shape, 1)
    s = jnp.where(jnp.logical_and(on_diag, c > r), -jnp.inf, s)

    m_prev = m_sc[...]                                     # (t, 1)
    m_new = jnp.maximum(m_prev, s.max(axis=-1, keepdims=True))
    alpha = jnp.exp(m_prev - m_new)
    p = jnp.exp(s - m_new)
    l_sc[...] = alpha * l_sc[...] + p.sum(axis=-1, keepdims=True)
    acc_sc[...] = alpha * acc_sc[...] + jnp.dot(
        p.astype(v.dtype), v, preferred_element_type=jnp.float32)
    m_sc[...] = m_new

    @pl.when(on_diag)
    def _finalize():
        # Exact division: runs once per q tile, keeps f32 parity
        # (approx reciprocal saved nothing here).
        o_ref[0] = (acc_sc[...] / l_sc[...]).astype(o_ref.dtype)


# ---------------------------------------------------------------------------
# Wrapper
# ---------------------------------------------------------------------------
def causal_attention_without_buffers(x, w_query, w_key, w_value, *,
                                     block_t=None, compute_dtype=None):
    """x: (B, T, d_in); w_*: (d_in, d_out). Returns (B, T, d_out).

    compute_dtype: dtype of q/k/v and the MXU matmul operands. Defaults to
    x.dtype; pass jnp.bfloat16 for the MXU fast path on f32 inputs (standard
    flash-attention accuracy tradeoff).
    """
    B, T, d_in = x.shape
    d_out = w_query.shape[1]
    out_dtype = x.dtype
    compute_dtype = out_dtype if compute_dtype is None else compute_dtype

    # Lane-dense padding of the contraction / head dims.
    d_in_p = _round_up(d_in, 128)
    d_out_p = _round_up(d_out, 128)

    # Token-tile size.  The binding constraint here is the (t, t) f32 scores
    # intermediate / vreg pressure, not VMEM capacity:
    #   * 256 fills v6e/v7x's 2x256^2 MXU and amortizes per-step overhead;
    #   * 512 for very long sequences (scores block = 1 MiB f32);
    #   * v5e (4x128^2 MXU): block_t=128 is a reasonable override.
    # On v7x keep B * n_t >= 2 so both TensorCores receive parallel work.
    if block_t is None:
        if T <= 256:
            block_t = max(8, _round_up(T, 8))
        elif T <= 4096:
            block_t = 256
        else:
            block_t = 512
    block_t = _round_up(block_t, 8)
    T_p = _round_up(T, block_t)
    n_t = T_p // block_t

    # Fold the 1/sqrt(d_k) softmax scale into W_query (d_k = real d_out):
    # mathematically identical to scaling the (T, T) scores, zero kernel cost.
    scale = 1.0 / math.sqrt(d_out)

    def _pad_w(w):
        return jnp.pad(w.astype(compute_dtype),
                       ((0, d_in_p - d_in), (0, d_out_p - d_out)))

    w_qkv = jnp.concatenate(
        [_pad_w(w_query * scale), _pad_w(w_key), _pad_w(w_value)], axis=1
    )  # (d_in_p, 3*d_out_p)

    x_p = jnp.pad(x, ((0, 0), (0, T_p - T), (0, d_in_p - d_in)))
    x_p = x_p.astype(compute_dtype)

    itemsize = jnp.dtype(compute_dtype).itemsize

    def _params(semantics, est_bytes):
        # Size the scoped-VMEM limit from the real footprint (v5e's default is
        # only 16 MiB); cap at 64 MiB (= v7x physical VMEM).
        limit = int(min(64 << 20, max(32 << 20, 2 * est_bytes)))
        return pltpu.CompilerParams(dimension_semantics=semantics,
                                    vmem_limit_bytes=limit)

    # --- fused QKV projection -------------------------------------------------
    est_qkv = (2 * block_t * d_in_p * itemsize            # x tile (double-buffered)
               + d_in_p * 3 * d_out_p * itemsize          # weight (single-buffered)
               + 2 * 3 * block_t * d_out_p * itemsize     # q/k/v tiles (double)
               + block_t * 3 * d_out_p * 4)               # f32 matmul result
    q, k, v = pl.pallas_call(
        _qkv_proj_kernel,
        out_shape=(
            jax.ShapeDtypeStruct((B, T_p, d_out_p), compute_dtype),
            jax.ShapeDtypeStruct((B, T_p, d_out_p), compute_dtype),
            jax.ShapeDtypeStruct((B, T_p, d_out_p), compute_dtype),
        ),
        grid_spec=pltpu.PrefetchScalarGridSpec(
            num_scalar_prefetch=0,
            grid=(B, n_t),
            in_specs=[
                pl.BlockSpec((1, block_t, d_in_p), lambda b, i: (b, i, 0)),
                # Constant index_map -> one buffer suffices; double-buffering
                # the full weight would blow scoped VMEM at real model dims.
                pl.BlockSpec((d_in_p, 3 * d_out_p), lambda b, i: (0, 0),
                             pipeline_mode=pl.Buffered(1)),
            ],
            out_specs=(
                pl.BlockSpec((1, block_t, d_out_p), lambda b, i: (b, i, 0)),
                pl.BlockSpec((1, block_t, d_out_p), lambda b, i: (b, i, 0)),
                pl.BlockSpec((1, block_t, d_out_p), lambda b, i: (b, i, 0)),
            ),
        ),
        compiler_params=_params(("parallel", "parallel"), est_qkv),
    )(x_p, w_qkv)

    # --- flash causal attention: lower-triangular schedule ---------------------
    # Only the n_t*(n_t+1)//2 tiles at or below the diagonal are ever visited.
    tri = [(qi, ki) for qi in range(n_t) for ki in range(qi + 1)]
    qi_of_step = jnp.asarray([t[0] for t in tri], dtype=jnp.int32)
    ki_of_step = jnp.asarray([t[1] for t in tri], dtype=jnp.int32)
    n_steps = len(tri)

    est_attn = (2 * 4 * block_t * d_out_p * itemsize       # q/k/v/out tiles
                + block_t * (d_out_p + 2) * 4              # f32 scratch (m, l, acc)
                + 2 * block_t * block_t * 4)               # scores / probs f32

    # TODO(synk): for moderate T on v6e (128 MiB VMEM), keeping a whole
    #             per-batch K/V resident would cut K/V HBM reads from
    #             O(n_t*T*d) to O(T*d); gate on a smaller T threshold on v7x.
    out_p = pl.pallas_call(
        _flash_causal_kernel,
        out_shape=jax.ShapeDtypeStruct((B, T_p, d_out_p), out_dtype),
        grid_spec=pltpu.PrefetchScalarGridSpec(
            num_scalar_prefetch=2,
            grid=(B, n_steps),
            in_specs=[
                pl.BlockSpec((1, block_t, d_out_p),
                             lambda b, s, qi_m, ki_m: (b, qi_m[s], 0)),
                pl.BlockSpec((1, block_t, d_out_p),
                             lambda b, s, qi_m, ki_m: (b, ki_m[s], 0)),
                pl.BlockSpec((1, block_t, d_out_p),
                             lambda b, s, qi_m, ki_m: (b, ki_m[s], 0)),
            ],
            out_specs=pl.BlockSpec((1, block_t, d_out_p),
                                   lambda b, s, qi_m, ki_m: (b, qi_m[s], 0)),
            scratch_shapes=[
                pltpu.VMEM((block_t, 1), jnp.float32),        # running max m
                pltpu.VMEM((block_t, 1), jnp.float32),        # running sum l
                pltpu.VMEM((block_t, d_out_p), jnp.float32),  # output accumulator
            ],
        ),
        compiler_params=_params(("parallel", "arbitrary"), est_attn),
    )(qi_of_step, ki_of_step, q, k, v)

    # Slice off token / head-dim padding.
    return out_p[:, :T, :d_out]


# ---------------------------------------------------------------------------
# Pure-JAX reference mirroring the PyTorch forward.
# ---------------------------------------------------------------------------
def _reference(x, wq, wk, wv):
    q = x @ wq
    k = x @ wk
    v = x @ wv
    scores = jnp.einsum("btd,bsd->bts", q, k)
    T = x.shape[1]
    mask = jnp.triu(jnp.ones((T, T), dtype=bool), k=1)
    scores = jnp.where(mask[None], -jnp.inf, scores)
    w = jax.nn.softmax(scores / math.sqrt(k.shape[-1]), axis=-1)
    return w @ v


if __name__ == "__main__":
    # Shapes implied by the module's surrounding script:
    #   inputs: (6, 3), batch = stack -> (2, 6, 3), d_in=3, d_out=2.
    inputs = jnp.array(
        [
            [0.43, 0.15, 0.89],
            [0.55, 0.87, 0.66],
            [0.57, 0.85, 0.64],
            [0.22, 0.58, 0.33],
            [0.77, 0.25, 0.10],
            [0.05, 0.80, 0.55],
        ],
        dtype=jnp.float32,
    )
    batch = jnp.stack((inputs, inputs), axis=0)  # (2, 6, 3)

    d_in = inputs.shape[1]
    d_out = 2

    # Deterministic parameter init (stand-in for nn.Linear weights, bias=False).
    key = jax.random.PRNGKey(0)
    kq, kk, kv = jax.random.split(key, 3)
    bound = 1.0 / math.sqrt(d_in)
    w_query = jax.random.uniform(kq, (d_in, d_out), jnp.float32, -bound, bound)
    w_key = jax.random.uniform(kk, (d_in, d_out), jnp.float32, -bound, bound)
    w_value = jax.random.uniform(kv, (d_in, d_out), jnp.float32, -bound, bound)

    out = causal_attention_without_buffers(batch, w_query, w_key, w_value)
    out = jax.block_until_ready(out)

    ref = _reference(batch, w_query, w_key, w_value)
    assert out.shape == (2, 6, 2), out.shape
    assert jnp.allclose(out, ref, atol=1e-5, rtol=1e-5), (out, ref)

    print("KERNEL_OK")
</pallas_src>

<mosaic_0001>
module attributes {stable_mosaic.version = 11 : i64} {
  func.func @_qkv_proj_kernel(%arg0: i32, %arg1: i32, %arg2: memref<1x8x128xf32, #tpu.memory_space<vmem>>, %arg3: memref<128x384xf32, #tpu.memory_space<vmem>>, %arg4: memref<1x8x128xf32, #tpu.memory_space<vmem>>, %arg5: memref<1x8x128xf32, #tpu.memory_space<vmem>>, %arg6: memref<1x8x128xf32, #tpu.memory_space<vmem>>) attributes {dimension_semantics = [#tpu.dimension_semantics<parallel>, #tpu.dimension_semantics<parallel>], iteration_bounds = array<i64: 2, 1>, scalar_prefetch = 0 : i64, scratch_operands = 0 : i64, tpu.core_type = #tpu.core_type<tc>, window_params = [{transform_indices = @transform_0, window_bounds = array<i64: 1, 8, 128>}, {pipeline_mode = #tpu.pipeline_mode<synchronous>, transform_indices = @transform_1, window_bounds = array<i64: 128, 384>}, {transform_indices = @transform_2, window_bounds = array<i64: 1, 8, 128>}, {transform_indices = @transform_3, window_bounds = array<i64: 1, 8, 128>}, {transform_indices = @transform_4, window_bounds = array<i64: 1, 8, 128>}]} {
    %c0 = arith.constant 0 : index
    %c0_0 = arith.constant 0 : index
    %c0_1 = arith.constant 0 : index
    %0 = vector.load %arg2[%c0, %c0_0, %c0_1] : memref<1x8x128xf32, #tpu.memory_space<vmem>>, vector<1x8x128xf32>
    %1 = vector.shape_cast %0 : vector<1x8x128xf32> to vector<8x128xf32>
    %c0_2 = arith.constant 0 : index
    %c0_3 = arith.constant 0 : index
    %2 = vector.load %arg3[%c0_2, %c0_3] : memref<128x384xf32, #tpu.memory_space<vmem>>, vector<128x384xf32>
    %cst = arith.constant dense<0.000000e+00> : vector<8x384xf32>
    %3 = tpu.matmul %1, %2, %cst {dimension_numbers = #tpu.dot_dimension_numbers<[1], [0], [0], [1], [0, 0, 1, 1], [], []>} : vector<8x128xf32>, vector<128x384xf32>, vector<8x384xf32> -> vector<8x384xf32>
    %4 = vector.extract_strided_slice %3 {offsets = [0, 0], sizes = [8, 128], strides = [1, 1]} : vector<8x384xf32> to vector<8x128xf32>
    %c0_4 = arith.constant 0 : index
    %c0_5 = arith.constant 0 : index
    %c0_6 = arith.constant 0 : index
    %5 = vector.load %arg4[%c0_4, %c0_5, %c0_6] : memref<1x8x128xf32, #tpu.memory_space<vmem>>, vector<1x8x128xf32>
    %6 = vector.shape_cast %5 : vector<1x8x128xf32> to vector<8x128xf32>
    %7 = vector.shape_cast %4 : vector<8x128xf32> to vector<1x8x128xf32>
    tpu.vector_store %arg4[%c0_4, %c0_5, %c0_6], %7 {strides = array<i32>} : memref<1x8x128xf32, #tpu.memory_space<vmem>>, vector<1x8x128xf32>,
    %8 = vector.extract_strided_slice %3 {offsets = [0, 128], sizes = [8, 128], strides = [1, 1]} : vector<8x384xf32> to vector<8x128xf32>
    %c0_7 = arith.constant 0 : index
    %c0_8 = arith.constant 0 : index
    %c0_9 = arith.constant 0 : index
    %9 = vector.load %arg5[%c0_7, %c0_8, %c0_9] : memref<1x8x128xf32, #tpu.memory_space<vmem>>, vector<1x8x128xf32>
    %10 = vector.shape_cast %9 : vector<1x8x128xf32> to vector<8x128xf32>
    %11 = vector.shape_cast %8 : vector<8x128xf32> to vector<1x8x128xf32>
    tpu.vector_store %arg5[%c0_7, %c0_8, %c0_9], %11 {strides = array<i32>} : memref<1x8x128xf32, #tpu.memory_space<vmem>>, vector<1x8x128xf32>,
    %12 = vector.extract_strided_slice %3 {offsets = [0, 256], sizes = [8, 128], strides = [1, 1]} : vector<8x384xf32> to vector<8x128xf32>
    %c0_10 = arith.constant 0 : index
    %c0_11 = arith.constant 0 : index
    %c0_12 = arith.constant 0 : index
    %13 = vector.load %arg6[%c0_10, %c0_11, %c0_12] : memref<1x8x128xf32, #tpu.memory_space<vmem>>, vector<1x8x128xf32>
    %14 = vector.shape_cast %13 : vector<1x8x128xf32> to vector<8x128xf32>
    %15 = vector.shape_cast %12 : vector<8x128xf32> to vector<1x8x128xf32>
    tpu.vector_store %arg6[%c0_10, %c0_11, %c0_12], %15 {strides = array<i32>} : memref<1x8x128xf32, #tpu.memory_space<vmem>>, vector<1x8x128xf32>,
    return
  }
  func.func @transform_0(%arg0: i32, %arg1: i32) -> (i32, i32, i32) {
    %c0_i32 = arith.constant 0 : i32
    %c0_i32_0 = arith.constant 0 : i32
    return %arg0, %arg1, %c0_i32 : i32, i32, i32
  }
  func.func @transform_1(%arg0: i32, %arg1: i32) -> (i32, i32) {
    %c0_i32 = arith.constant 0 : i32
    %c0_i32_0 = arith.constant 0 : i32
    %c0_i32_1 = arith.constant 0 : i32
    return %c0_i32, %c0_i32_0 : i32, i32
  }
  func.func @transform_2(%arg0: i32, %arg1: i32) -> (i32, i32, i32) {
    %c0_i32 = arith.constant 0 : i32
    %c0_i32_0 = arith.constant 0 : i32
    return %arg0, %arg1, %c0_i32 : i32, i32, i32
  }
  func.func @transform_3(%arg0: i32, %arg1: i32) -> (i32, i32, i32) {
    %c0_i32 = arith.constant 0 : i32
    %c0_i32_0 = arith.constant 0 : i32
    return %arg0, %arg1, %c0_i32 : i32, i32, i32
  }
  func.func @transform_4(%arg0: i32, %arg1: i32) -> (i32, i32, i32) {
    %c0_i32 = arith.constant 0 : i32
    %c0_i32_0 = arith.constant 0 : i32
    return %arg0, %arg1, %c0_i32 : i32, i32, i32
  }
}

</mosaic_0001>

<llo_original>
// kernel: tpu_custom_call.1
$region0: #{tpu_custom_call.1}
  #allocation0 [shape = 'u32[]', space=smem, size = 0x4, offset = 0x4, fixed_abs, tag = 'smem constant byte address 0x4 - core index']
  #allocation1 [shape = 'u32[72,128]{1,0:T(1,128)}', space=vmem, size = 0x9000, scoped, tag = 'internal scratch']
  %s0 = inlined_call_operand.hbm [shape: f32[2,8,128], index: 0, kind: input, shape index: {}]
  %s1 = inlined_call_operand.hbm [shape: f32[128,384], index: 1, kind: input, shape index: {}]
  %s2 = inlined_call_operand.hbm [shape: f32[2,8,128], index: 2, kind: output, shape index: {0}]
  %s3 = inlined_call_operand.hbm [shape: f32[2,8,128], index: 3, kind: output, shape index: {1}]
  %s4 = inlined_call_operand.hbm [shape: f32[2,8,128], index: 4, kind: output, shape index: {2}]
  %5 = xla_tuple %s2, %s3, %s4
  %s6 = sld [smem:[#allocation0]]
  $region65: #{tpu_custom_call.1} parent=0
    _
  %s8 = ssub.s32 1, %s6
  %s9 = scalar_select 0, %s8, %s6
  $region1: #{tpu_custom_call.1} parent=0
    #allocation2 [shape = 'u8[8192]{0}', space=vmem, size = 0x2000, scoped, tag = 'input window, operand 0']
    #allocation3 [shape = 's32[2]{0}', space=sflag, size = 0x8, scoped, tag = 'scoped memory for tpu_custom_call.1']
    #allocation4 [shape = 's32[2]{0}', space=sflag, size = 0x8, scoped, tag = 'scoped memory for tpu_custom_call.1']
    #allocation5 [shape = 'u8[196608]{0}', space=vmem, size = 0x30000, scoped, tag = 'input window, operand 1, single buffered']
    #allocation6 [shape = 's32[1]{0}', space=sflag, size = 0x4, scoped, tag = 'scoped memory for tpu_custom_call.1']
    #allocation7 [shape = 'u8[8192]{0}', space=vmem, size = 0x2000, scoped, tag = 'output window, operand 0']
    #allocation8 [shape = 'u8[8192]{0}', space=vmem, size = 0x2000, scoped, tag = 'output window, operand 1']
    #allocation9 [shape = 's32[2]{0}', space=sflag, size = 0x8, scoped, tag = 'scoped memory for tpu_custom_call.1']
    #allocation10 [shape = 'u8[8192]{0}', space=vmem, size = 0x2000, scoped, tag = 'output window, operand 2']
    %10 = vsyncpa [#allocation3], 0
    %s11 = scalar_lea.sflag [#allocation3], 1
    %12 = vsyncpa %s11, 0
    %13 = vsyncpa [#allocation6], 0
    %14 = vsyncpa [#allocation4], 0
    %s15 = scalar_lea.sflag [#allocation4], 1
    %16 = vsyncpa %s15, 0
    %17 = vsyncpa [#allocation9], 0
    %s18 = scalar_lea.sflag [#allocation9], 1
    %19 = vsyncpa %s18, 0
    loop: start=0, step=1, limit=4
    $region2: #{tpu_custom_call.1} parent=1 // loop_pre_header
      _
    $region3: #{tpu_custom_call.1} parent=1 // loop_header
      %s21 = sphi 0, %s25
      %p22 = scmp.ge.s32.totalorder %s21, 4
      %s28 = sphi 0, %s40
      %s29 = sphi 0, %s36
      %s30 = sphi 0, %s28
      %s31 = sphi 0, %s29
      %s32 = sphi 0, %s30
      %s33 = sphi 0, %s31
      %s45 = sphi 0, %s47
      %s48 = sphi 0, %s45
      %s49 = sphi 0, %s48
      %s65 = sphi 0, %s49
      %s69 = sphi 0, %s69
      %s71 = sphi 0, %s69
      %s72 = sphi 0, %s71
      %s86 = sphi 0, %s72
      %s94 = sphi 0, %s96
      %s97 = sphi 0, %s94
      %s98 = sphi 0, %s97
      %s114 = sphi 0, %s98
      %s122 = sphi 0, %s124
      %s125 = sphi 0, %s122
      %s126 = sphi 0, %s125
      %s142 = sphi 0, %s126
      %s150 = sphi 0, %s152
      %s153 = sphi 0, %s150
      %s154 = sphi 0, %s153
      %s170 = sphi 0, %s154
    $region4: #{tpu_custom_call.1} parent=1 // loop_header_branch
      %24 = sbr.rel (%p22) target = $region8
    $region5: #{tpu_custom_call.1} parent=1 // loop_body
      %s26 = ssub.s32 %s21, 1
      %s27 = ssub.s32 %s21, 2
      %s34 = sadd.s32 1, %s29
      %p35 = scmp.ge.s32.totalorder %s34, 1
      %s36 = scalar_select %p35, 0, %s34
      %s37 = sadd.s32 1, %s28
      %s38 = scalar_select %p35, %s37, %s28
      %p39 = scmp.ge.s32.totalorder %s38, 2
      %s40 = scalar_select %p39, 0, %s38
      %s41 = ssub.s32 %s28, %s40
      %s42 = ssub.s32 %s29, %s36
      %s43 = sor.u32 %s41, %s42
      %p44 = scmp.eq.s32.totalorder %s43, 0
      %s46 = sadd.s32 %s45, 1
      %s47 = scalar_select %p44, %s45, %s46
      %p50 = pneg %p44
      %p51 = scmp.eq.s32.totalorder %s21, 1
      %p52 = por %p50, %p51
      %p53 = scmp.ne.s32.totalorder %s45, %s48
      %p54 = scmp.eq.s32.totalorder %s21, 0
      %p55 = por %p53, %p54
      %p56 = scmp.ne.s32.totalorder %s45, %s48
      %p57 = scmp.eq.s32.totalorder %s26, 1
      %p58 = por %p56, %p57
      %p59 = scmp.ne.s32.totalorder %s48, %s49
      %p60 = scmp.eq.s32.totalorder %s26, 0
      %p61 = por %p59, %p60
      %p62 = scmp.ne.s32.totalorder %s48, %s49
      %p63 = scmp.eq.s32.totalorder %s27, 1
      %p64 = por %p62, %p63
      %p66 = scmp.ne.s32.totalorder %s49, %s65
      %p67 = scmp.eq.s32.totalorder %s27, 0
      %p68 = por %p66, %p67
      %s70 = sadd.s32 %s69, 1
      %p73 = scmp.eq.s32.totalorder %s21, 1
      %p74 = scmp.ne.s32.totalorder %s69, %s71
      %p75 = scmp.eq.s32.totalorder %s21, 0
      %p76 = por %p74, %p75
      %p77 = scmp.ne.s32.totalorder %s69, %s71
      %p78 = scmp.eq.s32.totalorder %s26, 1
      %p79 = por %p77, %p78
      %p80 = scmp.ne.s32.totalorder %s71, %s72
      %p81 = scmp.eq.s32.totalorder %s26, 0
      %p82 = por %p80, %p81
      %p83 = scmp.ne.s32.totalorder %s71, %s72
      %p84 = scmp.eq.s32.totalorder %s27, 1
      %p85 = por %p83, %p84
      %p87 = scmp.ne.s32.totalorder %s72, %s86
      %p88 = scmp.eq.s32.totalorder %s27, 0
      %p89 = por %p87, %p88
      %s90 = ssub.s32 %s28, %s40
      %s91 = ssub.s32 %s29, %s36
      %s92 = sor.u32 %s90, %s91
      %p93 = scmp.eq.s32.totalorder %s92, 0
      %s95 = sadd.s32 %s94, 1
      %s96 = scalar_select %p93, %s94, %s95
      %p99 = pneg %p93
      %p100 = scmp.eq.s32.totalorder %s21, 1
      %p101 = por %p99, %p100
      %p102 = scmp.ne.s32.totalorder %s94, %s97
      %p103 = scmp.eq.s32.totalorder %s21, 0
      %p104 = por %p102, %p103
      %p105 = scmp.ne.s32.totalorder %s94, %s97
      %p106 = scmp.eq.s32.totalorder %s26, 1
      %p107 = por %p105, %p106
      %p108 = scmp.ne.s32.totalorder %s97, %s98
      %p109 = scmp.eq.s32.totalorder %s26, 0
      %p110 = por %p108, %p109
      %p111 = scmp.ne.s32.totalorder %s97, %s98
      %p112 = scmp.eq.s32.totalorder %s27, 1
      %p113 = por %p111, %p112
      %p115 = scmp.ne.s32.totalorder %s98, %s114
      %p116 = scmp.eq.s32.totalorder %s27, 0
      %p117 = por %p115, %p116
      %s118 = ssub.s32 %s28, %s40
      %s119 = ssub.s32 %s29, %s36
      %s120 = sor.u32 %s118, %s119
      %p121 = scmp.eq.s32.totalorder %s120, 0
      %s123 = sadd.s32 %s122, 1
      %s124 = scalar_select %p121, %s122, %s123
      %p127 = pneg %p121
      %p128 = scmp.eq.s32.totalorder %s21, 1
      %p129 = por %p127, %p128
      %p130 = scmp.ne.s32.totalorder %s122, %s125
      %p131 = scmp.eq.s32.totalorder %s21, 0
      %p132 = por %p130, %p131
      %p133 = scmp.ne.s32.totalorder %s122, %s125
      %p134 = scmp.eq.s32.totalorder %s26, 1
      %p135 = por %p133, %p134
      %p136 = scmp.ne.s32.totalorder %s125, %s126
      %p137 = scmp.eq.s32.totalorder %s26, 0
      %p138 = por %p136, %p137
      %p139 = scmp.ne.s32.totalorder %s125, %s126
      %p140 = scmp.eq.s32.totalorder %s27, 1
      %p141 = por %p139, %p140
      %p143 = scmp.ne.s32.totalorder %s126, %s142
      %p144 = scmp.eq.s32.totalorder %s27, 0
      %p145 = por %p143, %p144
      %s146 = ssub.s32 %s28, %s40
      %s147 = ssub.s32 %s29, %s36
      %s148 = sor.u32 %s146, %s147
      %p149 = scmp.eq.s32.totalorder %s148, 0
      %s151 = sadd.s32 %s150, 1
      %s152 = scalar_select %p149, %s150, %s151
      %p155 = pneg %p149
      %p156 = scmp.eq.s32.totalorder %s21, 1
      %p157 = por %p155, %p156
      %p158 = scmp.ne.s32.totalorder %s150, %s153
      %p159 = scmp.eq.s32.totalorder %s21, 0
      %p160 = por %p158, %p159
      %p161 = scmp.ne.s32.totalorder %s150, %s153
      %p162 = scmp.eq.s32.totalorder %s26, 1
      %p163 = por %p161, %p162
      %p164 = scmp.ne.s32.totalorder %s153, %s154
      %p165 = scmp.eq.s32.totalorder %s26, 0
      %p166 = por %p164, %p165
      %p167 = scmp.ne.s32.totalorder %s153, %s154
      %p168 = scmp.eq.s32.totalorder %s27, 1
      %p169 = por %p167, %p168
      %p171 = scmp.ne.s32.totalorder %s154, %s170
      %p172 = scmp.eq.s32.totalorder %s27, 0
      %p173 = por %p171, %p172
      %p174 = scmp.le.s32.totalorder 1, %s21
      %p175 = scmp.lt.s32.totalorder %s21, 3
      %p176 = pnand %p174, %p175
      %p177 = pneg %p176
      // Predicated region
      $region9: #{tpu_custom_call.1} parent=5 // pred_check
        _
      $region10: #{tpu_custom_call.1} parent=5 // pred_check_branch
        %179 = sbr.rel (%p176) target = $region12
      $region11: #{tpu_custom_call.1} parent=5 // pred_region
        %s180 = ssub.s32 %s21, 1
        // Predicated region
        $region13: #{tpu_custom_call.1} parent=11 // pred_check
          %p181 = pneg %p82
        $region14: #{tpu_custom_call.1} parent=11 // pred_check_branch
          %183 = sbr.rel (%p181) target = $region16
        $region15: #{tpu_custom_call.1} parent=11 // pred_region
          %185 = vsyncadd [#allocation6], 0
          %s186 = sshll.u32 %s1, 4
          %s187 = int_to_ptr.hbm [resolvable:$true] %s186
          %s188 = sshll.u32 [#allocation5], 4
          %s189 = int_to_ptr.vmem [resolvable:$true] %s188
          %194 = dma.hbm_to_vmem [thread:$0]  %s187, 6144, %s189, [#allocation6], 384, 384, 24
        $region16: #{tpu_custom_call.1} parent=11 // pred_fallthru
          _
      $region12: #{tpu_custom_call.1} parent=5 // pred_fallthru
        _
      %p195 = scmp.lt.s32.totalorder %s21, 2
      // Predicated region
      $region17: #{tpu_custom_call.1} parent=5 // pred_check
        %p196 = pneg %p195
      $region18: #{tpu_custom_call.1} parent=5 // pred_check_branch
        %198 = sbr.rel (%p196) target = $region20
      $region19: #{tpu_custom_call.1} parent=5 // pred_region
        // Predicated region
        $region21: #{tpu_custom_call.1} parent=19 // pred_check
          %p199 = pneg %p55
        $region22: #{tpu_custom_call.1} parent=19 // pred_check_branch
          %201 = sbr.rel (%p199) target = $region24
        $region23: #{tpu_custom_call.1} parent=19 // pred_region
          %s202 = sand.u32 %s45, 1
          %s203 = scalar_lea.sflag [#allocation3], %s202
          %s204 = sand.u32 %s45, 1
          %s205 = smul.addr %s204, 8
          %s206 = scalar_lea.vmem [#allocation2], %s205
          %208 = vsyncadd %s203, 0
          %s209 = sadd.s32 %s29, %s28
          %s210 = smul.addr %s209, 8
          %s211 = scalar_lea.hbm %s0, %s210
          %s213 = sshll.u32 %s211, 4
          %s214 = int_to_ptr.hbm [resolvable:$true] %s213
          %s215 = sshll.u32 %s206, 4
          %s216 = int_to_ptr.vmem [resolvable:$true] %s215
          %218 = dma.hbm_to_vmem [thread:$0]  %s214, 128, %s216, %s203
        $region24: #{tpu_custom_call.1} parent=19 // pred_fallthru
          _
      $region20: #{tpu_custom_call.1} parent=5 // pred_fallthru
        _
      %p219 = scmp.le.s32.totalorder 1, %s21
      %p220 = scmp.lt.s32.totalorder %s21, 3
      %p221 = pnand %p219, %p220
      %p222 = pneg %p221
      // Predicated region
      $region25: #{tpu_custom_call.1} parent=5 // pred_check
        _
      $region26: #{tpu_custom_call.1} parent=5 // pred_check_branch
        %224 = sbr.rel (%p221) target = $region28
      $region27: #{tpu_custom_call.1} parent=5 // pred_region
        %s225 = ssub.s32 %s21, 1
        %s226 = sand.u32 %s48, 1
        %s227 = scalar_lea.sflag [#allocation3], %s226
        %s228 = sand.u32 %s48, 1
        %s229 = smul.addr %s228, 8
        %s230 = scalar_lea.vmem [#allocation2], %s229
        // Predicated region
        $region29: #{tpu_custom_call.1} parent=27 // pred_check
          %p231 = pneg %p61
        $region30: #{tpu_custom_call.1} parent=27 // pred_check_branch
          %233 = sbr.rel (%p231) target = $region32
        $region31: #{tpu_custom_call.1} parent=27 // pred_region
          %235 = dma.done %s227, 128
        $region32: #{tpu_custom_call.1} parent=27 // pred_fallthru
          _
        // Predicated region
        $region33: #{tpu_custom_call.1} parent=27 // pred_check
          %p236 = pneg %p82
        $region34: #{tpu_custom_call.1} parent=27 // pred_check_branch
          %238 = sbr.rel (%p236) target = $region36
        $region35: #{tpu_custom_call.1} parent=27 // pred_region
          %240 = dma.done [#allocation6], 6144
        $region36: #{tpu_custom_call.1} parent=27 // pred_fallthru
          _
        %s241 = sand.u32 %s48, 1
        %s242 = scalar_lea.sflag [#allocation3], %s241
        %s243 = sand.u32 %s48, 1
        %s244 = smul.addr %s243, 8
        %s245 = scalar_lea.vmem [#allocation2], %s244
        %p246 = pneg %p61
        %p247 = pneg %p58
        %p248 = pneg %p82
        %p249 = pneg %p79
        %p250 = pneg %p110
        %p251 = pneg %p107
        %s252 = sand.u32 %s97, 1
        %s253 = scalar_lea.sflag [#allocation4], %s252
        %s254 = sand.u32 %s97, 1
        %s255 = smul.addr %s254, 8
        %s256 = scalar_lea.vmem [#allocation7], %s255
        %p257 = pneg %p138
        %p258 = pneg %p135
        %s259 = sand.u32 %s26, 1
        %s260 = scalar_lea.sflag [#allocation9], %s259
        %s261 = sand.u32 %s125, 1
        %s262 = smul.addr %s261, 8
        %s263 = scalar_lea.vmem [#allocation8], %s262
        %p264 = pneg %p166
        %p265 = pneg %p163
        %s266 = sand.u32 %s26, 1
        %s267 = scalar_lea.sflag [#allocation9], %s266
        %s268 = sand.u32 %s153, 1
        %s269 = smul.addr %s268, 8
        %s270 = scalar_lea.vmem [#allocation10], %s269
        %v271 = vld [vmem:[%s230] sm:$0xff]
        %v272 = vld [vmem:[#allocation5] sm:$0xff]
        %v273 = vld [vmem:[#allocation5 + $0x8] sm:$0xff]
        %v274 = vld [vmem:[#allocation5 + $0x10] sm:$0xff]
        %v275 = vld [vmem:[#allocation5 + $0x18] sm:$0xff]
        %v276 = vld [vmem:[#allocation5 + $0x20] sm:$0xff]
        %v277 = vld [vmem:[#allocation5 + $0x28] sm:$0xff]
        %v278 = vld [vmem:[#allocation5 + $0x30] sm:$0xff]
        %v279 = vld [vmem:[#allocation5 + $0x38] sm:$0xff]
        %v280 = vld [vmem:[#allocation5 + $0x40] sm:$0xff]
        %v281 = vld [vmem:[#allocation5 + $0x48] sm:$0xff]
        %v282 = vld [vmem:[#allocation5 + $0x50] sm:$0xff]
        %v283 = vld [vmem:[#allocation5 + $0x58] sm:$0xff]
        %v284 = vld [vmem:[#allocation5 + $0x60] sm:$0xff]
        %v285 = vld [vmem:[#allocation5 + $0x68] sm:$0xff]
        %v286 = vld [vmem:[#allocation5 + $0x70] sm:$0xff]
        %v287 = vld [vmem:[#allocation5 + $0x78] sm:$0xff]
        %v288 = vld [vmem:[#allocation5 + $0x80] sm:$0xff]
        %v289 = vld [vmem:[#allocation5 + $0x88] sm:$0xff]
        %v290 = vld [vmem:[#allocation5 + $0x90] sm:$0xff]
        %v291 = vld [vmem:[#allocation5 + $0x98] sm:$0xff]
        %v292 = vld [vmem:[#allocation5 + $0xa0] sm:$0xff]
        %v293 = vld [vmem:[#allocation5 + $0xa8] sm:$0xff]
        %v294 = vld [vmem:[#allocation5 + $0xb0] sm:$0xff]
        %v295 = vld [vmem:[#allocation5 + $0xb8] sm:$0xff]
        %v296 = vld [vmem:[#allocation5 + $0xc0] sm:$0xff]
        %v297 = vld [vmem:[#allocation5 + $0xc8] sm:$0xff]
        %v298 = vld [vmem:[#allocation5 + $0xd0] sm:$0xff]
        %v299 = vld [vmem:[#allocation5 + $0xd8] sm:$0xff]
        %v300 = vld [vmem:[#allocation5 + $0xe0] sm:$0xff]
        %v301 = vld [vmem:[#allocation5 + $0xe8] sm:$0xff]
        %v302 = vld [vmem:[#allocation5 + $0xf0] sm:$0xff]
        %v303 = vld [vmem:[#allocation5 + $0xf8] sm:$0xff]
        %v304 = vld [vmem:[#allocation5 + $0x100] sm:$0xff]
        %v305 = vld [vmem:[#allocation5 + $0x108] sm:$0xff]
        %v306 = vld [vmem:[#allocation5 + $0x110] sm:$0xff]
        %v307 = vld [vmem:[#allocation5 + $0x118] sm:$0xff]
        %v308 = vld [vmem:[#allocation5 + $0x120] sm:$0xff]
        %v309 = vld [vmem:[#allocation5 + $0x128] sm:$0xff]
        %v310 = vld [vmem:[#allocation5 + $0x130] sm:$0xff]
        %v311 = vld [vmem:[#allocation5 + $0x138] sm:$0xff]
        %v312 = vld [vmem:[#allocation5 + $0x140] sm:$0xff]
        %v313 = vld [vmem:[#allocation5 + $0x148] sm:$0xff]
        %v314 = vld [vmem:[#allocation5 + $0x150] sm:$0xff]
        %v315 = vld [vmem:[#allocation5 + $0x158] sm:$0xff]
        %v316 = vld [vmem:[#allocation5 + $0x160] sm:$0xff]
        %v317 = vld [vmem:[#allocation5 + $0x168] sm:$0xff]
        %v318 = vld [vmem:[#allocation5 + $0x170] sm:$0xff]
        %v319 = vld [vmem:[#allocation5 + $0x178] sm:$0xff]
        %320 = vmatpush.msra.mxu0 %v317
        %321 = vmatpush.msra.mxu0 %v314
        %322 = vmatpush.msra.mxu0 %v311
        %323 = vmatpush.msra.mxu0 %v308
        %324 = vmatpush.msra.mxu0 %v305
        %325 = vmatpush.msra.mxu0 %v302
        %326 = vmatpush.msra.mxu0 %v299
        %327 = vmatpush.msra.mxu0 %v296
        %328 = vmatpush.msra.mxu0 %v293
        %329 = vmatpush.msra.mxu0 %v290
        %330 = vmatpush.msra.mxu0 %v287
        %331 = vmatpush.msra.mxu0 %v284
        %332 = vmatpush.msra.mxu0 %v281
        %333 = vmatpush.msra.mxu0 %v278
        %334 = vmatpush.msra.mxu0 %v275
        %335 = vmatpush.msra.mxu0 %v272
        %336 = vmatmul.f32.gmra.mxu0 %v271
        %v337 = vpop.f32.mrf.mxu0
        %v338 = vadd.f32 0.0, %v337
        %339 = vdwg.mxu0
        %340 = vmatpush.msra.mxu0 %v318
        %341 = vmatpush.msra.mxu0 %v315
        %342 = vmatpush.msra.mxu0 %v312
        %343 = vmatpush.msra.mxu0 %v309
        %344 = vmatpush.msra.mxu0 %v306
        %345 = vmatpush.msra.mxu0 %v303
        %346 = vmatpush.msra.mxu0 %v300
        %347 = vmatpush.msra.mxu0 %v297
        %348 = vmatpush.msra.mxu0 %v294
        %349 = vmatpush.msra.mxu0 %v291
        %350 = vmatpush.msra.mxu0 %v288
        %351 = vmatpush.msra.mxu0 %v285
        %352 = vmatpush.msra.mxu0 %v282
        %353 = vmatpush.msra.mxu0 %v279
        %354 = vmatpush.msra.mxu0 %v276
        %355 = vmatpush.msra.mxu0 %v273
        %356 = vmatmul.f32.gmra.mxu0 %v271
        %v357 = vpop.f32.mrf.mxu0
        %v358 = vadd.f32 0.0, %v357
        %359 = vdwg.mxu0
        %360 = vmatpush.msra.mxu0 %v319
        %361 = vmatpush.msra.mxu0 %v316
        %362 = vmatpush.msra.mxu0 %v313
        %363 = vmatpush.msra.mxu0 %v310
        %364 = vmatpush.msra.mxu0 %v307
        %365 = vmatpush.msra.mxu0 %v304
        %366 = vmatpush.msra.mxu0 %v301
        %367 = vmatpush.msra.mxu0 %v298
        %368 = vmatpush.msra.mxu0 %v295
        %369 = vmatpush.msra.mxu0 %v292
        %370 = vmatpush.msra.mxu0 %v289
        %371 = vmatpush.msra.mxu0 %v286
        %372 = vmatpush.msra.mxu0 %v283
        %373 = vmatpush.msra.mxu0 %v280
        %374 = vmatpush.msra.mxu0 %v277
        %375 = vmatpush.msra.mxu0 %v274
        %376 = vmatmul.f32.gmra.mxu0 %v271
        %v377 = vpop.f32.mrf.mxu0
        %v378 = vadd.f32 0.0, %v377
        %379 = vdwg.mxu0
        %380 = vst [vmem:[%s256] sm:$0xff] %v338
        %381 = vst [vmem:[%s263] sm:$0xff] %v358
        %382 = vst [vmem:[%s270] sm:$0xff] %v378
        %s383 = sand.u32 %s97, 1
        %s384 = scalar_lea.sflag [#allocation4], %s383
        %s385 = sand.u32 %s97, 1
        %s386 = smul.addr %s385, 8
        %s387 = scalar_lea.vmem [#allocation7], %s386
        %s388 = sand.u32 %s26, 1
        %s389 = scalar_lea.sflag [#allocation9], %s388
        %s390 = sand.u32 %s125, 1
        %s391 = smul.addr %s390, 8
        %s392 = scalar_lea.vmem [#allocation8], %s391
        %s393 = sand.u32 %s26, 1
        %s394 = scalar_lea.sflag [#allocation9], %s393
        %s395 = sand.u32 %s153, 1
        %s396 = smul.addr %s395, 8
        %s397 = scalar_lea.vmem [#allocation10], %s396
        // Predicated region
        $region37: #{tpu_custom_call.1} parent=27 // pred_check
          %p398 = pneg %p107
        $region38: #{tpu_custom_call.1} parent=27 // pred_check_branch
          %400 = sbr.rel (%p398) target = $region40
        $region39: #{tpu_custom_call.1} parent=27 // pred_region
          %402 = vsyncadd %s384, 0
          %s403 = sadd.s32 %s31, %s30
          %s404 = smul.addr %s403, 8
          %s405 = scalar_lea.hbm %s2, %s404
          %s407 = sshll.u32 %s387, 4
          %s408 = int_to_ptr.vmem [resolvable:$true] %s407
          %s409 = sshll.u32 %s405, 4
          %s410 = int_to_ptr.hbm [resolvable:$true] %s409
          %412 = dma.vmem_to_hbm [thread:$0]  %s408, 128, %s410, %s384
        $region40: #{tpu_custom_call.1} parent=27 // pred_fallthru
          _
        // Predicated region
        $region41: #{tpu_custom_call.1} parent=27 // pred_check
          %p413 = pneg %p135
        $region42: #{tpu_custom_call.1} parent=27 // pred_check_branch
          %415 = sbr.rel (%p413) target = $region44
        $region43: #{tpu_custom_call.1} parent=27 // pred_region
          %417 = vsyncadd %s389, 0
          %s418 = sadd.s32 %s31, %s30
          %s419 = smul.addr %s418, 8
          %s420 = scalar_lea.hbm %s3, %s419
          %s422 = sshll.u32 %s392, 4
          %s423 = int_to_ptr.vmem [resolvable:$true] %s422
          %s424 = sshll.u32 %s420, 4
          %s425 = int_to_ptr.hbm [resolvable:$true] %s424
          %427 = dma.vmem_to_hbm [thread:$0]  %s423, 128, %s425, %s389
        $region44: #{tpu_custom_call.1} parent=27 // pred_fallthru
          _
        // Predicated region
        $region45: #{tpu_custom_call.1} parent=27 // pred_check
          %p428 = pneg %p163
        $region46: #{tpu_custom_call.1} parent=27 // pred_check_branch
          %430 = sbr.rel (%p428) target = $region48
        $region47: #{tpu_custom_call.1} parent=27 // pred_region
          %432 = vsyncadd %s394, 0
          %s433 = sadd.s32 %s31, %s30
          %s434 = smul.addr %s433, 8
          %s435 = scalar_lea.hbm %s4, %s434
          %s437 = sshll.u32 %s397, 4
          %s438 = int_to_ptr.vmem [resolvable:$true] %s437
          %s439 = sshll.u32 %s435, 4
          %s440 = int_to_ptr.hbm [resolvable:$true] %s439
          %442 = dma.vmem_to_hbm [thread:$0]  %s438, 128, %s440, %s394
        $region48: #{tpu_custom_call.1} parent=27 // pred_fallthru
          _
      $region28: #{tpu_custom_call.1} parent=5 // pred_fallthru
        _
      %p443 = scmp.le.s32.totalorder 2, %s21
      // Predicated region
      $region49: #{tpu_custom_call.1} parent=5 // pred_check
        %p444 = pneg %p443
      $region50: #{tpu_custom_call.1} parent=5 // pred_check_branch
        %446 = sbr.rel (%p444) target = $region52
      $region51: #{tpu_custom_call.1} parent=5 // pred_region
        %s447 = ssub.s32 %s21, 2
        // Predicated region
        $region53: #{tpu_custom_call.1} parent=51 // pred_check
          %p448 = pneg %p113
        $region54: #{tpu_custom_call.1} parent=51 // pred_check_branch
          %450 = sbr.rel (%p448) target = $region56
        $region55: #{tpu_custom_call.1} parent=51 // pred_region
          %s451 = sand.u32 %s98, 1
          %s452 = scalar_lea.sflag [#allocation4], %s451
          %s453 = sand.u32 %s98, 1
          %s454 = smul.addr %s453, 8
          %s455 = scalar_lea.vmem [#allocation7], %s454
          %457 = dma.done %s452, 128
        $region56: #{tpu_custom_call.1} parent=51 // pred_fallthru
          _
        // Predicated region
        $region57: #{tpu_custom_call.1} parent=51 // pred_check
          %p458 = pneg %p141
        $region58: #{tpu_custom_call.1} parent=51 // pred_check_branch
          %460 = sbr.rel (%p458) target = $region60
        $region59: #{tpu_custom_call.1} parent=51 // pred_region
          %s461 = sand.u32 %s27, 1
          %s462 = scalar_lea.sflag [#allocation9], %s461
          %s463 = sand.u32 %s126, 1
          %s464 = smul.addr %s463, 8
          %s465 = scalar_lea.vmem [#allocation8], %s464
          %467 = dma.done %s462, 128
        $region60: #{tpu_custom_call.1} parent=51 // pred_fallthru
          _
        // Predicated region
        $region61: #{tpu_custom_call.1} parent=51 // pred_check
          %p468 = pneg %p169
        $region62: #{tpu_custom_call.1} parent=51 // pred_check_branch
          %470 = sbr.rel (%p468) target = $region64
        $region63: #{tpu_custom_call.1} parent=51 // pred_region
          %s471 = sand.u32 %s27, 1
          %s472 = scalar_lea.sflag [#allocation9], %s471
          %s473 = sand.u32 %s154, 1
          %s474 = smul.addr %s473, 8
          %s475 = scalar_lea.vmem [#allocation10], %s474
          %477 = dma.done %s472, 128
        $region64: #{tpu_custom_call.1} parent=51 // pred_fallthru
          _
      $region52: #{tpu_custom_call.1} parent=5 // pred_fallthru
        _
    $region6: #{tpu_custom_call.1} parent=1 // loop_footer
      %s25 = sadd.s32 1, %s21
    $region7: #{tpu_custom_call.1} parent=1 // loop_footer_branch
      %20 = sbr.rel target = $region3
    $region8: #{tpu_custom_call.1} parent=1 // loop_exit
      _
    %478 = vsyncpa [#allocation3], 1
    %s479 = scalar_lea.sflag [#allocation3], 1
    %480 = vsyncpa %s479, 1
    %481 = vsyncpa [#allocation6], 1
    %482 = vsyncpa [#allocation4], 1
    %s483 = scalar_lea.sflag [#allocation4], 1
    %484 = vsyncpa %s483, 1
    %485 = vsyncpa [#allocation9], 1
    %s486 = scalar_lea.sflag [#allocation9], 1
    %487 = vsyncpa %s486, 1

</llo_original>
